<compile_context>
chip_gen: v7x
topology: tpu7x:2x2x1
jax: 0.10.0
libtpu: 0.0.40
codegen_flags: <defaults>
</compile_context>

<pallas_src>
import jax
import jax.numpy as jnp
from jax.experimental import pallas as pl
from jax.experimental.pallas import tpu as pltpu

_NEG = -1e30  # bias on padded action columns -> exp() == 0 -> zero probability


def actor_kernel(x_ref, w1_ref, b1_ref, w2_ref, b2_ref, w3_ref, b3_ref, out_ref):
    # x and weights arrive as bf16 (MXU-native); accumulate in f32.
    x = x_ref[...]

    # fc1 + ReLU (elementwise path in f32)
    h1 = jnp.dot(x, w1_ref[...], preferred_element_type=jnp.float32) + b1_ref[...]
    h1 = jnp.maximum(h1, 0.0)

    # fc2 + ReLU
    h2 = jnp.dot(h1.astype(jnp.bfloat16), w2_ref[...],
                 preferred_element_type=jnp.float32) + b2_ref[...]
    h2 = jnp.maximum(h2, 0.0)

    # fc3 (logits); padded columns carry a -1e30 bias -> zero probability.
    logits = jnp.dot(h2.astype(jnp.bfloat16), w3_ref[...],
                     preferred_element_type=jnp.float32) + b3_ref[...]

    # Numerically-stable softmax over the (lane-dense, padded) last axis.
    m = jnp.max(logits, axis=-1, keepdims=True)
    e = jnp.exp(logits - m)
    denom = jnp.sum(e, axis=-1, keepdims=True)
    # approx=True -> EUP vrcp (free slot); softmax tolerance is well within it.
    out_ref[...] = (e * pl.reciprocal(denom, approx=True)).astype(out_ref.dtype)


def _round_up(x, m):
    return ((x + m - 1) // m) * m


def prepare_params(params):
    """Pad / cast parameters ONCE (call at init, not per forward).

    Hidden / action dims -> multiples of 128 (lane-dense); input dim -> multiple
    of 8 only (sublane alignment; K doesn't need 128 lanes and the kernel is
    memory-bound, so an underfilled MXU K is free). Weights bf16, biases f32.
    Padded action columns get a -1e30 bias so softmax assigns them ~0 prob.
    """
    w1, b1, w2, b2, w3, b3 = params
    input_dims, fc1 = w1.shape
    fc2 = w2.shape[1]
    n_actions = w3.shape[1]

    IN_P = _round_up(input_dims, 8)
    H1_P = _round_up(fc1, 128)
    H2_P = _round_up(fc2, 128)
    A_P = _round_up(n_actions, 128)

    def pad2(a, r, c, dtype, fill=0.0):
        out = jnp.full((r, c), fill, dtype)
        return out.at[: a.shape[0], : a.shape[1]].set(a.astype(dtype))

    return (
        pad2(w1, IN_P, H1_P, jnp.bfloat16),
        pad2(b1, 1, H1_P, jnp.float32),
        pad2(w2, H1_P, H2_P, jnp.bfloat16),
        pad2(b2, 1, H2_P, jnp.float32),
        pad2(w3, H2_P, A_P, jnp.bfloat16),
        pad2(b3, 1, A_P, jnp.float32, fill=_NEG),  # mask padded actions
    )


def actor_forward(state, prepared, n_actions, *, batch_tile=1024):
    """Actor MLP + softmax. Returns action probabilities (B, n_actions), bf16.

    `prepared` is the output of prepare_params() (padded / cast once).
    """
    w1_p, b1_p, w2_p, b2_p, w3_p, b3_p = prepared
    B, input_dims = state.shape
    IN_P, H1_P = w1_p.shape
    H2_P = w2_p.shape[1]
    A_P = w3_p.shape[1]
    assert input_dims <= IN_P

    # Batch tile: multiple of 16 (bf16 sublane packing). Default 1024 keeps the
    # HBM-bound x/out stream near roofline; hard cap 4096 keeps per-step VMEM
    # (double-buffered x/out tiles + 4 f32 intermediates of width 128) at a few
    # MiB - safe even on v7x's 64 MiB-physical / 32 MiB-scoped VMEM.
    TB = min(batch_tile, _round_up(B, 16), 4096)
    if B >= 32:
        # Guarantee >= 2 grid programs so the "parallel" batch axis shards
        # across v7x's 2 TensorCores (no effect on single-TC v5e/v6e).
        TB = min(TB, _round_up(-(-B // 2), 16))
    B_P = _round_up(B, TB)

    # Cast to bf16; only materialize a padded copy if padding is actually needed.
    x = state.astype(jnp.bfloat16)
    if (B_P, IN_P) != (B, input_dims):
        x = jnp.zeros((B_P, IN_P), jnp.bfloat16).at[:B, :input_dims].set(x)

    grid = (B_P // TB,)

    out = pl.pallas_call(
        actor_kernel,
        out_shape=jax.ShapeDtypeStruct((B_P, A_P), jnp.bfloat16),  # bf16 writeback
        grid_spec=pltpu.PrefetchScalarGridSpec(
            num_scalar_prefetch=0,
            grid=grid,
            in_specs=[
                pl.BlockSpec((TB, IN_P), lambda i: (i, 0)),     # x: tiled on batch
                pl.BlockSpec((IN_P, H1_P), lambda i: (0, 0)),   # weights resident
                pl.BlockSpec((1, H1_P), lambda i: (0, 0)),
                pl.BlockSpec((H1_P, H2_P), lambda i: (0, 0)),
                pl.BlockSpec((1, H2_P), lambda i: (0, 0)),
                pl.BlockSpec((H2_P, A_P), lambda i: (0, 0)),
                pl.BlockSpec((1, A_P), lambda i: (0, 0)),
            ],
            out_specs=pl.BlockSpec((TB, A_P), lambda i: (i, 0)),  # lane-dense out
            # NOTE: if xprof ever shows exposed x-tile DMA after tiling changes,
            # add pipeline_mode=pl.Buffered(3) to in_specs[0].
        ),
        compiler_params=pltpu.CompilerParams(
            dimension_semantics=("parallel",),
            # 32 MiB is safe on every generation (v5e/v6e: 128 MiB physical,
            # v7x: 64 MiB physical); actual usage at default TB is ~3-6 MiB.
            vmem_limit_bytes=32 << 20,
        ),
    )(x, w1_p, b1_p, w2_p, b2_p, w3_p, b3_p)

    # Slice away batch / action padding.
    return out[:B, :n_actions]


def init_params(key, input_dims, fc1_dims, fc2_dims, n_actions):
    """Deterministic init mimicking nn.Linear's U(-1/sqrt(fan_in), 1/sqrt(fan_in)).
    Weights stored as (in_features, out_features); biases as (1, out_features)."""
    ks = jax.random.split(key, 6)

    def linear(kw, kb, fan_in, fan_out):
        bound = 1.0 / jnp.sqrt(fan_in)
        w = jax.random.uniform(kw, (fan_in, fan_out), jnp.float32, -bound, bound)
        b = jax.random.uniform(kb, (1, fan_out), jnp.float32, -bound, bound)
        return w, b

    w1, b1 = linear(ks[0], ks[1], input_dims, fc1_dims)
    w2, b2 = linear(ks[2], ks[3], fc1_dims, fc2_dims)
    w3, b3 = linear(ks[4], ks[5], fc2_dims, n_actions)
    return (w1, b1, w2, b2, w3, b3)


def reference_forward(state, params):
    w1, b1, w2, b2, w3, b3 = params
    h1 = jnp.maximum(state @ w1 + b1, 0.0)
    h2 = jnp.maximum(h1 @ w2 + b2, 0.0)
    logits = h2 @ w3 + b3
    return jax.nn.softmax(logits, axis=-1)


if __name__ == "__main__":
    # Small shapes consistent with the module: batch=8, input_dims=32,
    # fc1=fc2=64, n_actions=8.
    B, INPUT_DIMS, FC1, FC2, N_ACTIONS = 8, 32, 64, 64, 8

    key = jax.random.PRNGKey(0)
    k_state, k_params = jax.random.split(key)

    state = jax.random.normal(k_state, (B, INPUT_DIMS), jnp.float32)
    params = init_params(k_params, INPUT_DIMS, FC1, FC2, N_ACTIONS)

    # Pad / cast weights ONCE (not inside the per-step forward).
    prepared = prepare_params(params)

    fwd = jax.jit(lambda s, p: actor_forward(s, p, N_ACTIONS))
    probs = jax.block_until_ready(fwd(state, prepared))

    # Sanity check against pure-JAX f32 reference (Categorical's probs).
    # Kernel uses bf16 matmul operands, bf16 output and approx reciprocal ->
    # relaxed tolerance.
    ref = reference_forward(state, params)
    probs_f32 = probs.astype(jnp.float32)
    assert probs.shape == (B, N_ACTIONS)
    assert probs.dtype == jnp.bfloat16
    assert jnp.allclose(probs_f32, ref, atol=2e-2, rtol=2e-2)
    assert jnp.allclose(jnp.sum(probs_f32, axis=-1), 1.0, atol=1e-2)

    # TODO(synk): Categorical distribution object (sampling / log_prob) and the
    # Adam optimizer / checkpoint I/O have no Pallas equivalent; the kernel
    # returns the softmax probabilities the distribution wraps.
    print("KERNEL_OK")
</pallas_src>

<mosaic_0001>
module attributes {stable_mosaic.version = 11 : i64} {
  func.func @actor_kernel(%arg0: i32, %arg1: memref<16x32xbf16, #tpu.memory_space<vmem>>, %arg2: memref<32x128xbf16, #tpu.memory_space<vmem>>, %arg3: memref<1x128xf32, #tpu.memory_space<vmem>>, %arg4: memref<128x128xbf16, #tpu.memory_space<vmem>>, %arg5: memref<1x128xf32, #tpu.memory_space<vmem>>, %arg6: memref<128x128xbf16, #tpu.memory_space<vmem>>, %arg7: memref<1x128xf32, #tpu.memory_space<vmem>>, %arg8: memref<16x128xbf16, #tpu.memory_space<vmem>>) attributes {dimension_semantics = [#tpu.dimension_semantics<parallel>], iteration_bounds = array<i64: 1>, scalar_prefetch = 0 : i64, scratch_operands = 0 : i64, tpu.core_type = #tpu.core_type<tc>, window_params = [{transform_indices = @transform_0, window_bounds = array<i64: 16, 32>}, {pipeline_mode = #tpu.pipeline_mode<synchronous>, transform_indices = @transform_1, window_bounds = array<i64: 32, 128>}, {pipeline_mode = #tpu.pipeline_mode<synchronous>, transform_indices = @transform_2, window_bounds = array<i64: 1, 128>}, {pipeline_mode = #tpu.pipeline_mode<synchronous>, transform_indices = @transform_3, window_bounds = array<i64: 128, 128>}, {pipeline_mode = #tpu.pipeline_mode<synchronous>, transform_indices = @transform_4, window_bounds = array<i64: 1, 128>}, {pipeline_mode = #tpu.pipeline_mode<synchronous>, transform_indices = @transform_5, window_bounds = array<i64: 128, 128>}, {pipeline_mode = #tpu.pipeline_mode<synchronous>, transform_indices = @transform_6, window_bounds = array<i64: 1, 128>}, {transform_indices = @transform_7, window_bounds = array<i64: 16, 128>}]} {
    %c0 = arith.constant 0 : index
    %c0_0 = arith.constant 0 : index
    %0 = vector.load %arg1[%c0, %c0_0] : memref<16x32xbf16, #tpu.memory_space<vmem>>, vector<16x32xbf16>
    %c0_1 = arith.constant 0 : index
    %c0_2 = arith.constant 0 : index
    %1 = vector.load %arg2[%c0_1, %c0_2] : memref<32x128xbf16, #tpu.memory_space<vmem>>, vector<32x128xbf16>
    %cst = arith.constant dense<0.000000e+00> : vector<16x128xf32>
    %2 = tpu.matmul %0, %1, %cst {dimension_numbers = #tpu.dot_dimension_numbers<[1], [0], [0], [1], [0, 0, 1, 1], [], []>} : vector<16x32xbf16>, vector<32x128xbf16>, vector<16x128xf32> -> vector<16x128xf32>
    %c0_3 = arith.constant 0 : index
    %c0_4 = arith.constant 0 : index
    %3 = vector.load %arg3[%c0_3, %c0_4] : memref<1x128xf32, #tpu.memory_space<vmem>>, vector<1x128xf32>
    %4 = vector.broadcast %3 : vector<1x128xf32> to vector<16x128xf32>
    %5 = arith.addf %2, %4 : vector<16x128xf32>
    %cst_5 = arith.constant 0.000000e+00 : f32
    %6 = vector.broadcast %cst_5 : f32 to vector<16x128xf32>
    %7 = arith.maximumf %5, %6 : vector<16x128xf32>
    %8 = arith.truncf %7 : vector<16x128xf32> to vector<16x128xbf16>
    %c0_6 = arith.constant 0 : index
    %c0_7 = arith.constant 0 : index
    %9 = vector.load %arg4[%c0_6, %c0_7] : memref<128x128xbf16, #tpu.memory_space<vmem>>, vector<128x128xbf16>
    %cst_8 = arith.constant dense<0.000000e+00> : vector<16x128xf32>
    %10 = tpu.matmul %8, %9, %cst_8 {dimension_numbers = #tpu.dot_dimension_numbers<[1], [0], [0], [1], [0, 0, 1, 1], [], []>} : vector<16x128xbf16>, vector<128x128xbf16>, vector<16x128xf32> -> vector<16x128xf32>
    %c0_9 = arith.constant 0 : index
    %c0_10 = arith.constant 0 : index
    %11 = vector.load %arg5[%c0_9, %c0_10] : memref<1x128xf32, #tpu.memory_space<vmem>>, vector<1x128xf32>
    %12 = vector.broadcast %11 : vector<1x128xf32> to vector<16x128xf32>
    %13 = arith.addf %10, %12 : vector<16x128xf32>
    %cst_11 = arith.constant 0.000000e+00 : f32
    %14 = vector.broadcast %cst_11 : f32 to vector<16x128xf32>
    %15 = arith.maximumf %13, %14 : vector<16x128xf32>
    %16 = arith.truncf %15 : vector<16x128xf32> to vector<16x128xbf16>
    %c0_12 = arith.constant 0 : index
    %c0_13 = arith.constant 0 : index
    %17 = vector.load %arg6[%c0_12, %c0_13] : memref<128x128xbf16, #tpu.memory_space<vmem>>, vector<128x128xbf16>
    %cst_14 = arith.constant dense<0.000000e+00> : vector<16x128xf32>
    %18 = tpu.matmul %16, %17, %cst_14 {dimension_numbers = #tpu.dot_dimension_numbers<[1], [0], [0], [1], [0, 0, 1, 1], [], []>} : vector<16x128xbf16>, vector<128x128xbf16>, vector<16x128xf32> -> vector<16x128xf32>
    %c0_15 = arith.constant 0 : index
    %c0_16 = arith.constant 0 : index
    %19 = vector.load %arg7[%c0_15, %c0_16] : memref<1x128xf32, #tpu.memory_space<vmem>>, vector<1x128xf32>
    %20 = vector.broadcast %19 : vector<1x128xf32> to vector<16x128xf32>
    %21 = arith.addf %18, %20 : vector<16x128xf32>
    %cst_17 = arith.constant dense<0xFF800000> : vector<16xf32>
    %22 = vector.multi_reduction <maximumf>, %21, %cst_17 [1] : vector<16x128xf32> to vector<16xf32>
    %23 = vector.shape_cast %22 : vector<16xf32> to vector<16x1xf32>
    %24 = vector.broadcast %23 : vector<16x1xf32> to vector<16x128xf32>
    %25 = arith.subf %21, %24 : vector<16x128xf32>
    %26 = math.exp %25 : vector<16x128xf32>
    %cst_18 = arith.constant dense<0.000000e+00> : vector<16xf32>
    %27 = vector.multi_reduction <add>, %26, %cst_18 [1] : vector<16x128xf32> to vector<16xf32>
    %28 = vector.shape_cast %27 : vector<16xf32> to vector<16x1xf32>
    %29 = tpu.reciprocal %28 {approx = true} : vector<16x1xf32> -> vector<16x1xf32>
    %30 = vector.broadcast %29 : vector<16x1xf32> to vector<16x128xf32>
    %31 = arith.mulf %26, %30 : vector<16x128xf32>
    %32 = arith.truncf %31 : vector<16x128xf32> to vector<16x128xbf16>
    %c0_19 = arith.constant 0 : index
    %c0_20 = arith.constant 0 : index
    %33 = vector.load %arg8[%c0_19, %c0_20] : memref<16x128xbf16, #tpu.memory_space<vmem>>, vector<16x128xbf16>
    tpu.vector_store %arg8[%c0_19, %c0_20], %32 {strides = array<i32>} : memref<16x128xbf16, #tpu.memory_space<vmem>>, vector<16x128xbf16>,
    return
  }
  func.func @transform_0(%arg0: i32) -> (i32, i32) {
    %c0_i32 = arith.constant 0 : i32
    %c0_i32_0 = arith.constant 0 : i32
    return %arg0, %c0_i32 : i32, i32
  }
  func.func @transform_1(%arg0: i32) -> (i32, i32) {
    %c0_i32 = arith.constant 0 : i32
    %c0_i32_0 = arith.constant 0 : i32
    %c0_i32_1 = arith.constant 0 : i32
    return %c0_i32, %c0_i32_0 : i32, i32
  }
  func.func @transform_2(%arg0: i32) -> (i32, i32) {
    %c0_i32 = arith.constant 0 : i32
    %c0_i32_0 = arith.constant 0 : i32
    %c0_i32_1 = arith.constant 0 : i32
    return %c0_i32, %c0_i32_0 : i32, i32
  }
  func.func @transform_3(%arg0: i32) -> (i32, i32) {
    %c0_i32 = arith.constant 0 : i32
    %c0_i32_0 = arith.constant 0 : i32
    %c0_i32_1 = arith.constant 0 : i32
    return %c0_i32, %c0_i32_0 : i32, i32
  }
  func.func @transform_4(%arg0: i32) -> (i32, i32) {
    %c0_i32 = arith.constant 0 : i32
    %c0_i32_0 = arith.constant 0 : i32
    %c0_i32_1 = arith.constant 0 : i32
    return %c0_i32, %c0_i32_0 : i32, i32
  }
  func.func @transform_5(%arg0: i32) -> (i32, i32) {
    %c0_i32 = arith.constant 0 : i32
    %c0_i32_0 = arith.constant 0 : i32
    %c0_i32_1 = arith.constant 0 : i32
    return %c0_i32, %c0_i32_0 : i32, i32
  }
  func.func @transform_6(%arg0: i32) -> (i32, i32) {
    %c0_i32 = arith.constant 0 : i32
    %c0_i32_0 = arith.constant 0 : i32
    %c0_i32_1 = arith.constant 0 : i32
    return %c0_i32, %c0_i32_0 : i32, i32
  }
  func.func @transform_7(%arg0: i32) -> (i32, i32) {
    %c0_i32 = arith.constant 0 : i32
    %c0_i32_0 = arith.constant 0 : i32
    return %arg0, %c0_i32 : i32, i32
  }
}

</mosaic_0001>

<llo_original>
// kernel: _lambda_.1
$region0: #{_lambda_.1}
  #allocation0 [shape = 'u32[]', space=smem, size = 0x4, offset = 0x4, fixed_abs, tag = 'smem constant byte address 0x4 - core index']
  #allocation1 [shape = 'u32[144,128]{1,0:T(1,128)}', space=vmem, size = 0x12000, scoped, tag = 'internal scratch']
  %s0 = inlined_call_operand.vmem [shape: bf16[16,32], index: 0, kind: input, shape index: {}]
  %s1 = inlined_call_operand.vmem [shape: bf16[32,128], index: 1, kind: input, shape index: {}]
  %s2 = inlined_call_operand.vmem [shape: f32[1,128], index: 2, kind: input, shape index: {}]
  %s3 = inlined_call_operand.hbm [shape: bf16[128,128], index: 3, kind: input, shape index: {}]
  %s4 = inlined_call_operand.vmem [shape: f32[1,128], index: 4, kind: input, shape index: {}]
  %s5 = inlined_call_operand.hbm [shape: bf16[128,128], index: 5, kind: input, shape index: {}]
  %s6 = inlined_call_operand.vmem [shape: f32[1,128], index: 6, kind: input, shape index: {}]
  %s7 = inlined_call_operand.vmem [shape: bf16[16,128], index: 7, kind: output, shape index: {}]
  %s8 = sld [smem:[#allocation0]]
  $region46: #{_lambda_.1} parent=0
    _
  %s10 = ssub.s32 1, %s8
  %s11 = scalar_select 0, %s10, %s8
  $region1: #{_lambda_.1} parent=0
    #allocation2 [shape = 'u8[32768]{0}', space=vmem, size = 0x8000, scoped, tag = 'input window, operand 3, single buffered']
    #allocation3 [shape = 's32[1]{0}', space=sflag, size = 0x4, scoped, tag = 'scoped memory for _lambda_.1']
    #allocation4 [shape = 'u8[32768]{0}', space=vmem, size = 0x8000, scoped, tag = 'input window, operand 5, single buffered']
    #allocation5 [shape = 's32[1]{0}', space=sflag, size = 0x4, scoped, tag = 'scoped memory for _lambda_.1']
    %12 = vsyncpa [#allocation3], 0
    %13 = vsyncpa [#allocation5], 0
    // Predicated region
    $region2: #{_lambda_.1} parent=1 // pred_check
      _
    $region3: #{_lambda_.1} parent=1 // pred_check_branch
      %15 = sbr.rel (0) target = $region5
    $region4: #{_lambda_.1} parent=1 // pred_region
      _
    $region5: #{_lambda_.1} parent=1 // pred_fallthru
      _
    // Predicated region
    $region6: #{_lambda_.1} parent=1 // pred_check
      _
    $region7: #{_lambda_.1} parent=1 // pred_check_branch
      %17 = sbr.rel (0) target = $region9
    $region8: #{_lambda_.1} parent=1 // pred_region
      _
    $region9: #{_lambda_.1} parent=1 // pred_fallthru
      _
    // Predicated region
    $region10: #{_lambda_.1} parent=1 // pred_check
      _
    $region11: #{_lambda_.1} parent=1 // pred_check_branch
      %19 = sbr.rel (0) target = $region13
    $region12: #{_lambda_.1} parent=1 // pred_region
      _
    $region13: #{_lambda_.1} parent=1 // pred_fallthru
      _
    // Predicated region
    $region14: #{_lambda_.1} parent=1 // pred_check
      _
    $region15: #{_lambda_.1} parent=1 // pred_check_branch
      %21 = sbr.rel (0) target = $region17
    $region16: #{_lambda_.1} parent=1 // pred_region
      %s23 = ssub.s32 1024, 1024
      %24 = vsyncadd [#allocation3], %s23
      %s25 = sshll.u32 [#allocation2], 4
      %s26 = int_to_ptr.vmem [resolvable:$true] %s25
      %31 = dma.hbm_to_vmem [thread:$0]  %s3, 1024, %s26, [#allocation3], 64, 64, 4
    $region17: #{_lambda_.1} parent=1 // pred_fallthru
      _
    // Predicated region
    $region18: #{_lambda_.1} parent=1 // pred_check
      _
    $region19: #{_lambda_.1} parent=1 // pred_check_branch
      %33 = sbr.rel (0) target = $region21
    $region20: #{_lambda_.1} parent=1 // pred_region
      _
    $region21: #{_lambda_.1} parent=1 // pred_fallthru
      _
    // Predicated region
    $region22: #{_lambda_.1} parent=1 // pred_check
      _
    $region23: #{_lambda_.1} parent=1 // pred_check_branch
      %35 = sbr.rel (0) target = $region25
    $region24: #{_lambda_.1} parent=1 // pred_region
      %s37 = ssub.s32 1024, 1024
      %38 = vsyncadd [#allocation5], %s37
      %s39 = sshll.u32 [#allocation4], 4
      %s40 = int_to_ptr.vmem [resolvable:$true] %s39
      %45 = dma.hbm_to_vmem [thread:$0]  %s5, 1024, %s40, [#allocation5], 64, 64, 4
    $region25: #{_lambda_.1} parent=1 // pred_fallthru
      _
    // Predicated region
    $region26: #{_lambda_.1} parent=1 // pred_check
      _
    $region27: #{_lambda_.1} parent=1 // pred_check_branch
      %47 = sbr.rel (0) target = $region29
    $region28: #{_lambda_.1} parent=1 // pred_region
      _
    $region29: #{_lambda_.1} parent=1 // pred_fallthru
      _
    // Predicated region
    $region30: #{_lambda_.1} parent=1 // pred_check
      _
    $region31: #{_lambda_.1} parent=1 // pred_check_branch
      %49 = sbr.rel (0) target = $region33
    $region32: #{_lambda_.1} parent=1 // pred_region
      %50 = dma.done [#allocation3], 1024
    $region33: #{_lambda_.1} parent=1 // pred_fallthru
      _
    // Predicated region
    $region34: #{_lambda_.1} parent=1 // pred_check
      _
    $region35: #{_lambda_.1} parent=1 // pred_check_branch
      %52 = sbr.rel (0) target = $region37
    $region36: #{_lambda_.1} parent=1 // pred_region
      %53 = dma.done [#allocation5], 1024
    $region37: #{_lambda_.1} parent=1 // pred_fallthru
      _
    %v55 = vld [vmem:[%s0] sm:$0xf]
    %v56 = vld [vmem:[%s0 + $0x4] sm:$0xf]
    %v57 = vld [vmem:[%s1] sm:$0xf]
    %v58 = vld [vmem:[%s1 + $0x4] sm:$0xf]
    %v59 = vld [vmem:[%s1 + $0x8] sm:$0xf]
    %v60 = vld [vmem:[%s1 + $0xc] sm:$0xf]
    %v61 = vld [vmem:[%s2] sm:$0x1]
    %v63 = vlaneseq
    %v64 = vshrl.u32 %v63, 7
    %v65 = vsub.s32 0, %v64
    %v66 = vrot.slane %v61, %v65
    %v70 = vunpack.c.l.b16 %v55
    %v71 = vunpack.c.l.b16 %v56
    %v72 = vpack.c.b16 %v71, %v70
    %v77 = vunpack.c.l.b16 %v57
    %v78 = vunpack.c.l.b16 %v58
    %v79 = vunpack.c.l.b16 %v59
    %v80 = vunpack.c.l.b16 %v60
    %v81 = vpack.c.b16 %v78, %v77
    %v82 = vpack.c.b16 %v80, %v79
    %vm85 = vcmask 261120
    %v87 = vsel %vm85, %v72, 0
    %89 = vmatprep.subr.bf16.mxu0 0
    %90 = vmatpush1.bf16.msra.mxu0 %v81
    %91 = vmatprep.subr.bf16.mxu0 0
    %92 = vmatpush1.bf16.msra.mxu0 %v82
    %93 = vmatprep.subr.bf16.mxu0 0
    %94 = vmatpush1.bf16.msra.mxu0 0
    %95 = vmatprep.subr.bf16.mxu0 0
    %96 = vmatpush1.bf16.msra.mxu0 0
    %97 = vmatprep.subr.bf16.mxu0 0
    %98 = vmatpush1.bf16.msra.mxu0 0
    %99 = vmatprep.subr.bf16.mxu0 0
    %100 = vmatpush1.bf16.msra.mxu0 0
    %101 = vmatprep.subr.bf16.mxu0 0
    %102 = vmatpush1.bf16.msra.mxu0 0
    %103 = vmatprep.subr.bf16.mxu0 0
    %104 = vmatpush1.bf16.msra.mxu0 0
    %105 = vmatprep.subr.bf16.mxu0 0
    %106 = vmatpush1.bf16.msra.mxu0 0
    %107 = vmatprep.subr.bf16.mxu0 0
    %108 = vmatpush1.bf16.msra.mxu0 0
    %109 = vmatprep.subr.bf16.mxu0 0
    %110 = vmatpush1.bf16.msra.mxu0 0
    %111 = vmatprep.subr.bf16.mxu0 0
    %112 = vmatpush1.bf16.msra.mxu0 0
    %113 = vmatprep.subr.bf16.mxu0 0
    %114 = vmatpush1.bf16.msra.mxu0 0
    %115 = vmatprep.subr.bf16.mxu0 0
    %116 = vmatpush1.bf16.msra.mxu0 0
    %117 = vmatprep.subr.bf16.mxu0 0
    %118 = vmatpush1.bf16.msra.mxu0 0
    %119 = vmatprep.subr.bf16.mxu0 0
    %120 = vmatpush1.bf16.msra.mxu0 0
    %121 = vmatprep.mubr.bf16.mxu0 0
    %122 = vmatmul.mubr.bf16.gmra.mrb[0].mxu0 %v87
    %v123 = vpop.f32.mrb[0].mxu0
    %v124 = vadd.f32 %v66, %v123
    %v125 = vpop.f32.mrb[0].mxu0
    %v126 = vpop.f32.mrb[0].mxu0
    %v127 = vadd.f32 %v66, %v126
    %v128 = vpop.f32.mrb[0].mxu0
    %129 = vdwg.mxu0
    %v130 = vmax.f32 %v124, 0.0
    %v131 = vmax.f32 %v127, 0.0
    %v132 = vpack.c.bf16 %v131, %v130
    %v133 = vld [vmem:[#allocation2] sm:$0xf]
    %v134 = vld [vmem:[#allocation2 + $0x4] sm:$0xf]
    %v135 = vld [vmem:[#allocation2 + $0x8] sm:$0xf]
    %v136 = vld [vmem:[#allocation2 + $0xc] sm:$0xf]
    %v137 = vld [vmem:[#allocation2 + $0x10] sm:$0xf]
    %v138 = vld [vmem:[#allocation2 + $0x14] sm:$0xf]
    %v139 = vld [vmem:[#allocation2 + $0x18] sm:$0xf]
    %v140 = vld [vmem:[#allocation2 + $0x1c] sm:$0xf]
    %v141 = vld [vmem:[#allocation2 + $0x20] sm:$0xf]
    %v142 = vld [vmem:[#allocation2 + $0x24] sm:$0xf]
    %v143 = vld [vmem:[#allocation2 + $0x28] sm:$0xf]
    %v144 = vld [vmem:[#allocation2 + $0x2c] sm:$0xf]
    %v145 = vld [vmem:[#allocation2 + $0x30] sm:$0xf]
    %v146 = vld [vmem:[#allocation2 + $0x34] sm:$0xf]
    %v147 = vld [vmem:[#allocation2 + $0x38] sm:$0xf]
    %v148 = vld [vmem:[#allocation2 + $0x3c] sm:$0xf]
    %v149 = vld [vmem:[%s4] sm:$0x1]
    %v151 = vlaneseq
    %v152 = vshrl.u32 %v151, 7
    %v153 = vsub.s32 0, %v152
    %v154 = vrot.slane %v149, %v153
    %v172 = vunpack.c.l.b16 %v133
    %v173 = vunpack.c.l.b16 %v134
    %v174 = vunpack.c.l.b16 %v135
    %v175 = vunpack.c.l.b16 %v136
    %v176 = vunpack.c.l.b16 %v137
    %v177 = vunpack.c.l.b16 %v138
    %v178 = vunpack.c.l.b16 %v139
    %v179 = vunpack.c.l.b16 %v140
    %v180 = vunpack.c.l.b16 %v141
    %v181 = vunpack.c.l.b16 %v142
    %v182 = vunpack.c.l.b16 %v143
    %v183 = vunpack.c.l.b16 %v144
    %v184 = vunpack.c.l.b16 %v145
    %v185 = vunpack.c.l.b16 %v146
    %v186 = vunpack.c.l.b16 %v147
    %v187 = vunpack.c.l.b16 %v148
    %v188 = vpack.c.b16 %v173, %v172
    %v189 = vpack.c.b16 %v175, %v174
    %v190 = vpack.c.b16 %v177, %v176
    %v191 = vpack.c.b16 %v179, %v178
    %v192 = vpack.c.b16 %v181, %v180
    %v193 = vpack.c.b16 %v183, %v182
    %v194 = vpack.c.b16 %v185, %v184
    %v195 = vpack.c.b16 %v187, %v186
    %204 = vmatprep.subr.bf16.mxu0 0
    %205 = vmatpush1.bf16.msra.mxu0 %v188
    %206 = vmatprep.subr.bf16.mxu0 0
    %207 = vmatpush1.bf16.msra.mxu0 %v189
    %208 = vmatprep.subr.bf16.mxu0 0
    %209 = vmatpush1.bf16.msra.mxu0 %v190
    %210 = vmatprep.subr.bf16.mxu0 0
    %211 = vmatpush1.bf16.msra.mxu0 %v191
    %212 = vmatprep.subr.bf16.mxu0 0
    %213 = vmatpush1.bf16.msra.mxu0 %v192
    %214 = vmatprep.subr.bf16.mxu0 0
    %215 = vmatpush1.bf16.msra.mxu0 %v193
    %216 = vmatprep.subr.bf16.mxu0 0
    %217 = vmatpush1.bf16.msra.mxu0 %v194
    %218 = vmatprep.subr.bf16.mxu0 0
    %219 = vmatpush1.bf16.msra.mxu0 %v195
    %220 = vmatprep.subr.bf16.mxu0 0
    %221 = vmatpush1.bf16.msra.mxu0 0
    %222 = vmatprep.subr.bf16.mxu0 0
    %223 = vmatpush1.bf16.msra.mxu0 0
    %224 = vmatprep.subr.bf16.mxu0 0
    %225 = vmatpush1.bf16.msra.mxu0 0
    %226 = vmatprep.subr.bf16.mxu0 0
    %227 = vmatpush1.bf16.msra.mxu0 0
    %228 = vmatprep.subr.bf16.mxu0 0
    %229 = vmatpush1.bf16.msra.mxu0 0
    %230 = vmatprep.subr.bf16.mxu0 0
    %231 = vmatpush1.bf16.msra.mxu0 0
    %232 = vmatprep.subr.bf16.mxu0 0
    %233 = vmatpush1.bf16.msra.mxu0 0
    %234 = vmatprep.subr.bf16.mxu0 0
    %235 = vmatpush1.bf16.msra.mxu0 0
    %236 = vmatprep.mubr.bf16.mxu0 0
    %237 = vmatmul.mubr.bf16.gmra.mrb[0].mxu0 %v132
    %v238 = vpop.f32.mrb[0].mxu0
    %v239 = vadd.f32 %v154, %v238
    %v240 = vpop.f32.mrb[0].mxu0
    %v241 = vpop.f32.mrb[0].mxu0
    %v242 = vadd.f32 %v154, %v241
    %v243 = vpop.f32.mrb[0].mxu0
    %244 = vdwg.mxu0
    %v245 = vmax.f32 %v239, 0.0
    %v246 = vmax.f32 %v242, 0.0
    %v247 = vpack.c.bf16 %v246, %v245
    %v248 = vld [vmem:[#allocation4] sm:$0xf]
    %v249 = vld [vmem:[#allocation4 + $0x4] sm:$0xf]
    %v250 = vld [vmem:[#allocation4 + $0x8] sm:$0xf]
    %v251 = vld [vmem:[#allocation4 + $0xc] sm:$0xf]
    %v252 = vld [vmem:[#allocation4 + $0x10] sm:$0xf]
    %v253 = vld [vmem:[#allocation4 + $0x14] sm:$0xf]
    %v254 = vld [vmem:[#allocation4 + $0x18] sm:$0xf]
    %v255 = vld [vmem:[#allocation4 + $0x1c] sm:$0xf]
    %v256 = vld [vmem:[#allocation4 + $0x20] sm:$0xf]
    %v257 = vld [vmem:[#allocation4 + $0x24] sm:$0xf]
    %v258 = vld [vmem:[#allocation4 + $0x28] sm:$0xf]
    %v259 = vld [vmem:[#allocation4 + $0x2c] sm:$0xf]
    %v260 = vld [vmem:[#allocation4 + $0x30] sm:$0xf]
    %v261 = vld [vmem:[#allocation4 + $0x34] sm:$0xf]
    %v262 = vld [vmem:[#allocation4 + $0x38] sm:$0xf]
    %v263 = vld [vmem:[#allocation4 + $0x3c] sm:$0xf]
    %v264 = vld [vmem:[%s6] sm:$0x1]
    %v266 = vlaneseq
    %v267 = vshrl.u32 %v266, 7
    %v268 = vsub.s32 0, %v267
    %v269 = vrot.slane %v264, %v268
    %v287 = vunpack.c.l.b16 %v248
    %v288 = vunpack.c.l.b16 %v249
    %v289 = vunpack.c.l.b16 %v250
    %v290 = vunpack.c.l.b16 %v251
    %v291 = vunpack.c.l.b16 %v252
    %v292 = vunpack.c.l.b16 %v253
    %v293 = vunpack.c.l.b16 %v254
    %v294 = vunpack.c.l.b16 %v255
    %v295 = vunpack.c.l.b16 %v256
    %v296 = vunpack.c.l.b16 %v257
    %v297 = vunpack.c.l.b16 %v258
    %v298 = vunpack.c.l.b16 %v259
    %v299 = vunpack.c.l.b16 %v260
    %v300 = vunpack.c.l.b16 %v261
    %v301 = vunpack.c.l.b16 %v262
    %v302 = vunpack.c.l.b16 %v263
    %v303 = vpack.c.b16 %v288, %v287
    %v304 = vpack.c.b16 %v290, %v289
    %v305 = vpack.c.b16 %v292, %v291
    %v306 = vpack.c.b16 %v294, %v293
    %v307 = vpack.c.b16 %v296, %v295
    %v308 = vpack.c.b16 %v298, %v297
    %v309 = vpack.c.b16 %v300, %v299
    %v310 = vpack.c.b16 %v302, %v301
    %319 = vmatprep.subr.bf16.mxu0 0
    %320 = vmatpush1.bf16.msra.mxu0 %v303
    %321 = vmatprep.subr.bf16.mxu0 0
    %322 = vmatpush1.bf16.msra.mxu0 %v304
    %323 = vmatprep.subr.bf16.mxu0 0
    %324 = vmatpush1.bf16.msra.mxu0 %v305
    %325 = vmatprep.subr.bf16.mxu0 0
    %326 = vmatpush1.bf16.msra.mxu0 %v306
    %327 = vmatprep.subr.bf16.mxu0 0
    %328 = vmatpush1.bf16.msra.mxu0 %v307
    %329 = vmatprep.subr.bf16.mxu0 0
    %330 = vmatpush1.bf16.msra.mxu0 %v308
    %331 = vmatprep.subr.bf16.mxu0 0
    %332 = vmatpush1.bf16.msra.mxu0 %v309
    %333 = vmatprep.subr.bf16.mxu0 0
    %334 = vmatpush1.bf16.msra.mxu0 %v310
    %335 = vmatprep.subr.bf16.mxu0 0
    %336 = vmatpush1.bf16.msra.mxu0 0
    %337 = vmatprep.subr.bf16.mxu0 0
    %338 = vmatpush1.bf16.msra.mxu0 0
    %339 = vmatprep.subr.bf16.mxu0 0
    %340 = vmatpush1.bf16.msra.mxu0 0
    %341 = vmatprep.subr.bf16.mxu0 0
    %342 = vmatpush1.bf16.msra.mxu0 0
    %343 = vmatprep.subr.bf16.mxu0 0
    %344 = vmatpush1.bf16.msra.mxu0 0
    %345 = vmatprep.subr.bf16.mxu0 0
    %346 = vmatpush1.bf16.msra.mxu0 0
    %347 = vmatprep.subr.bf16.mxu0 0
    %348 = vmatpush1.bf16.msra.mxu0 0
    %349 = vmatprep.subr.bf16.mxu0 0
    %350 = vmatpush1.bf16.msra.mxu0 0
    %351 = vmatprep.mubr.bf16.mxu0 0
    %352 = vmatmul.mubr.bf16.gmra.mrb[0].mxu0 %v247
    %v353 = vpop.f32.mrb[0].mxu0
    %v354 = vadd.f32 %v269, %v353
    %v355 = vpop.f32.mrb[0].mxu0
    %v356 = vpop.f32.mrb[0].mxu0
    %v357 = vadd.f32 %v269, %v356
    %v358 = vpop.f32.mrb[0].mxu0
    %359 = vdwg.mxu0
    %360 = vmax.xlane.f32.xlu0 %v354
    %v361 = vpop.xlane.xlu0 %360
    %362 = vmax.xlane.f32.xlu0 %v357
    %v363 = vpop.xlane.xlu0 %362
    %v364 = vsub.f32 %v354, %v361
    %v365 = vsub.f32 %v357, %v363
    %v366 = vmul.f32 %v364, 1.442695
    %v367 = vpow.pop %v366
    %v368 = vmul.f32 %v365, 1.442695
    %v369 = vpow.pop %v368
    %370 = vadd.xlane.f32.xlu0 %v367
    %v371 = vpop.xlane.xlu0 %370
    %372 = vadd.xlane.f32.xlu0 %v369
    %v373 = vpop.xlane.xlu0 %372
    %v374 = vrcp.pop %v371
    %v375 = vrcp.pop %v373
    %v376 = vmul.f32 %v367, %v374
    %v377 = vmul.f32 %v369, %v375
    %v378 = vpack.c.bf16 %v377, %v376
    %v380 = vunpack.c.l.b16 %v378
    %v381 = vunpack.c.h.b16 %v378
    %v382 = vpack.c.b16 %v380, %v380
    %v383 = vpack.c.b16 %v381, %v381
    %386 = vst [vmem:[%s7] sm:$0xf] %v382
    %387 = vst [vmem:[%s7 + $0x4] sm:$0xf] %v383
    // Predicated region
    $region38: #{_lambda_.1} parent=1 // pred_check
      _
    $region39: #{_lambda_.1} parent=1 // pred_check_branch
      %389 = sbr.rel (0) target = $region41
    $region40: #{_lambda_.1} parent=1 // pred_region
      _
    $region41: #{_lambda_.1} parent=1 // pred_fallthru
      _
    // Predicated region
    $region42: #{_lambda_.1} parent=1 // pred_check
      _
    $region43: #{_lambda_.1} parent=1 // pred_check_branch
      %391 = sbr.rel (0) target = $region45
    $region44: #{_lambda_.1} parent=1 // pred_region
      _
    $region45: #{_lambda_.1} parent=1 // pred_fallthru
      _
    %392 = vsyncpa [#allocation3], 1
    %393 = vsyncpa [#allocation5], 1

</llo_original>
